<compile_context>
chip_gen: v5e
topology: v5e:2x2
jax: 0.10.0
libtpu: 0.0.40
codegen_flags: <defaults>
</compile_context>

<pallas_src>
import jax
import jax.numpy as jnp
from jax import lax
from jax.experimental import pallas as pl
from jax.experimental.pallas import tpu as pltpu

# ---------------- config (small, consistent with the module) ----------------
B = 2            # batch
T = 8            # num tokens == context_length
D = 64           # emb_dim
H = 4            # n_heads
KV = 2           # n_kv_groups
HD = D // H      # head_dim = 16
GS = H // KV     # group_size = 2
HIDDEN = 128     # feed-forward hidden dim
ROPE_BASE = 10000.0
EPS = 1e-5

QW = H * HD          # 64  packed query width
KW = KV * HD         # 32  packed key/value width
QKVW = QW + 2 * KW   # 128 packed q|k|v width (one full vreg of lanes)
BT = B * T           # 16  flattened token rows


# ---------------- RoPE tables (glue, plain JAX) ----------------
def precompute_rope_params(head_dim, theta_base, context_length):
    inv_freq = 1.0 / theta_base ** (
        jnp.arange(0, head_dim, 2, dtype=jnp.float32) / head_dim
    )
    positions = jnp.arange(context_length, dtype=jnp.float32)
    angles = positions[:, None] * inv_freq[None, :]
    angles = jnp.concatenate([angles, angles], axis=1)
    return jnp.cos(angles), jnp.sin(angles)


# ---------------- the fused transformer-block kernel ----------------
def transformer_block_kernel(
    x_ref,      # (BT, D)        f32   flattened residual stream
    n1w_ref,    # (1, D)         f32
    wqkv_ref,   # (D, 256)       bf16  [Wq | Wk | Wv | rot(Wq) | rot(Wk) | pad]
    cos_ref,    # (BT, 128)      f32   [cos_q*scale | cos_k | ones]
    sin_ref,    # (BT, 128)      f32   [sin_q*scale | sin_k | zeros]
    bias_ref,   # (H*BT, BT)     f32   additive same-batch+causal mask (0 / -inf)
    wo_ref,     # (D, D)         bf16
    n2w_ref,    # (1, D)         f32
    w12_ref,    # (D, 2*HIDDEN)  bf16  [W1 | W2]
    w3_ref,     # (HIDDEN, D)    bf16
    o_ref,      # (BT, D)        f32
    ctx_ref,    # (BT, D)        bf16  scratch: per-head contexts, lane-packed
):
    x = x_ref[...]                                        # (BT, D) f32

    def rmsnorm(v, w):
        m = jnp.mean(v * v, axis=-1, keepdims=True)
        return (v * lax.rsqrt(m + EPS)) * w

    # ---------------- attention branch ----------------
    h = rmsnorm(x, n1w_ref[...]).astype(jnp.bfloat16)     # norm1(x).to(bf16)

    # single fused projection: [q | k | v | rot(q) | rot(k) | 0]  -> (BT, 256) f32
    qkv = jnp.dot(h, wqkv_ref[...], preferred_element_type=jnp.float32)

    # RoPE (+ V passthrough) as ONE full-vreg FMA: the two 128-lane halves of
    # qkv are lane-aligned, cos=1 / sin=0 over the V lanes, 1/sqrt(HD) is
    # folded into the Q cos/sin lanes.
    rope = qkv[:, :QKVW] * cos_ref[...] + qkv[:, QKVW:2 * QKVW] * sin_ref[...]
    q_r = rope[:, :QW].astype(jnp.bfloat16)               # (BT, 64)
    k_r = rope[:, QW:QW + KW].astype(jnp.bfloat16)        # (BT, 32)
    v_b = rope[:, QW + KW:QW + 2 * KW].astype(jnp.bfloat16)  # (BT, 32)

    # per-head scores (no explicit transpose: contract dim 1 with dim 1),
    # stacked along sublanes into one (H*BT, BT) block.
    dn = (((1,), (1,)), ((), ()))
    s_blocks = []
    for hh in range(H):                                   # H = 4 unrolled
        g = hh // GS                                      # repeat_interleave
        qh = q_r[:, hh * HD:(hh + 1) * HD]                # (BT, HD)
        kh = k_r[:, g * HD:(g + 1) * HD]                  # (BT, HD)
        s_blocks.append(
            lax.dot_general(qh, kh, dimension_numbers=dn,
                            preferred_element_type=jnp.float32))
    s_all = jnp.concatenate(s_blocks, axis=0) + bias_ref[...]   # (H*BT, BT)

    # ONE merged softmax over the stacked block (fewer XLU reduces / EUP pushes)
    s_all = s_all - jnp.max(s_all, axis=-1, keepdims=True)
    p_all = jnp.exp(s_all)
    p_all = p_all * pl.reciprocal(jnp.sum(p_all, axis=-1, keepdims=True),
                                  approx=True)
    p_all = p_all.astype(jnp.bfloat16)

    # per-head P@V, lane-offset stores into the (BT, D) bf16 ctx scratch
    for hh in range(H):
        g = hh // GS
        vh = v_b[:, g * HD:(g + 1) * HD]                  # (BT, HD)
        ph = p_all[hh * BT:(hh + 1) * BT, :]              # (BT, BT)
        ctx_ref[:, hh * HD:(hh + 1) * HD] = jnp.dot(
            ph, vh, preferred_element_type=jnp.float32).astype(jnp.bfloat16)

    # ONE output projection with K=64 instead of 4 accumulations with K=16
    att = jnp.dot(ctx_ref[...], wo_ref[...],
                  preferred_element_type=jnp.float32)     # (BT, D) f32

    x = x + att                                           # residual (f32)

    # ---------------- feed-forward (SwiGLU) branch ----------------
    h2 = rmsnorm(x, n2w_ref[...]).astype(jnp.bfloat16)    # norm2(x).to(bf16)
    ff12 = jnp.dot(h2, w12_ref[...],
                   preferred_element_type=jnp.float32)    # (BT, 2*HIDDEN) f32
    a = ff12[:, :HIDDEN]
    g2 = ff12[:, HIDDEN:]
    gated = (a * jax.nn.sigmoid(a) * g2).astype(jnp.bfloat16)   # silu(a) * g
    ff = jnp.dot(gated, w3_ref[...],
                 preferred_element_type=jnp.float32)      # (BT, D) f32

    o_ref[...] = x + ff                                   # residual (f32)


# ---------------- wrapper ----------------
def _rope_rotation_cols(w, nheads):
    """Signed column permutation of w such that x @ result == rotate_half(x @ w)."""
    w4 = w.reshape(D, nheads, 2, HD // 2)
    wr = jnp.stack([-w4[:, :, 1, :], w4[:, :, 0, :]], axis=2)
    return wr.reshape(D, nheads * HD)


@jax.jit
def transformer_block(x, params):
    n1w, wq, wk, wv, wo, cos, sin, n2w, w1, w2, w3 = params

    # fused, lane-aligned projection weights (padded to 256 lanes):
    #   [Wq | Wk | Wv | rot(Wq) | rot(Wk) | 0]
    pad = jnp.zeros((D, KW), wq.dtype)
    w_qkv = jnp.concatenate(
        [wq, wk, wv, _rope_rotation_cols(wq, H), _rope_rotation_cols(wk, KV), pad],
        axis=1)                                           # (D, 256)

    # fused SwiGLU up-projections: [W1 | W2] -> (D, 2*HIDDEN)
    w12 = jnp.concatenate([w1, w2], axis=1)

    # RoPE tables packed to the (BT, 128) [q | k | v] layout; 1/sqrt(HD) folded
    # into the Q lanes; cos=1 / sin=0 over the V lanes (pure passthrough).
    scale = 1.0 / (HD ** 0.5)
    cos32 = cos.astype(jnp.float32)
    sin32 = sin.astype(jnp.float32)
    cs_cos = jnp.concatenate(
        [jnp.tile(cos32, (B, H)) * scale,
         jnp.tile(cos32, (B, KV)),
         jnp.ones((BT, KW), jnp.float32)], axis=1)        # (BT, 128)
    cs_sin = jnp.concatenate(
        [jnp.tile(sin32, (B, H)) * scale,
         jnp.tile(sin32, (B, KV)),
         jnp.zeros((BT, KW), jnp.float32)], axis=1)       # (BT, 128)

    # same-batch + causal mask as an additive bias, tiled for the merged
    # (H*BT, BT) score block.
    row = jnp.arange(BT)
    col = jnp.arange(BT)
    masked = ((row[:, None] // T) != (col[None, :] // T)) | \
             ((col[None, :] % T) > (row[:, None] % T))
    bias = jnp.where(masked, -jnp.inf, 0.0).astype(jnp.float32)   # (BT, BT)
    bias_all = jnp.tile(bias, (H, 1))                              # (H*BT, BT)

    x2d = x.reshape(BT, D)

    vmem = pl.BlockSpec(memory_space=pltpu.MemorySpace.VMEM)
    out = pl.pallas_call(
        transformer_block_kernel,
        out_shape=jax.ShapeDtypeStruct((BT, D), jnp.float32),
        in_specs=[vmem] * 10,
        out_specs=vmem,
        scratch_shapes=[pltpu.VMEM((BT, D), jnp.bfloat16)],
    )(x2d, n1w, w_qkv, cs_cos, cs_sin, bias_all, wo, n2w, w12, w3)
    return out.reshape(B, T, D)


# ---------------- plain-JAX reference (for a sanity check) ----------------
def reference_block(x, params):
    n1w, wq, wk, wv, wo, cos, sin, n2w, w1, w2, w3 = params
    cos32, sin32 = cos.astype(jnp.float32), sin.astype(jnp.float32)

    def rmsnorm(v, w):
        m = jnp.mean(v * v, axis=-1, keepdims=True)
        return (v * lax.rsqrt(m + EPS)) * w

    def rope(t):  # (..., T, HD)
        x1, x2 = t[..., : HD // 2], t[..., HD // 2:]
        rot = jnp.concatenate([-x2, x1], axis=-1)
        return t * cos32 + rot * sin32

    h = rmsnorm(x, n1w).astype(jnp.float32)
    q = (h @ wq.astype(jnp.float32)).reshape(B, T, H, HD).transpose(0, 2, 1, 3)
    k = (h @ wk.astype(jnp.float32)).reshape(B, T, KV, HD).transpose(0, 2, 1, 3)
    v = (h @ wv.astype(jnp.float32)).reshape(B, T, KV, HD).transpose(0, 2, 1, 3)
    q, k = rope(q), rope(k)
    k = jnp.repeat(k, GS, axis=1)
    v = jnp.repeat(v, GS, axis=1)
    s = jnp.einsum("bhqd,bhkd->bhqk", q, k) / (HD ** 0.5)
    mask = jnp.triu(jnp.ones((T, T), bool), 1)
    s = jnp.where(mask, -jnp.inf, s)
    p = jax.nn.softmax(s, axis=-1)
    ctx = jnp.einsum("bhqk,bhkd->bhqd", p, v).transpose(0, 2, 1, 3).reshape(B, T, D)
    x = x + ctx @ wo.astype(jnp.float32)
    h2 = rmsnorm(x, n2w)
    a = h2 @ w1.astype(jnp.float32)
    ff = (jax.nn.silu(a) * (h2 @ w2.astype(jnp.float32))) @ w3.astype(jnp.float32)
    return x + ff


# ---------------- deterministic params + run ----------------
if __name__ == "__main__":
    key = jax.random.PRNGKey(0)
    ks = jax.random.split(key, 8)

    def w(k, shape):
        return (0.02 * jax.random.normal(k, shape, jnp.float32)).astype(jnp.bfloat16)

    wq = w(ks[0], (D, D))
    wk = w(ks[1], (D, KV * HD))
    wv = w(ks[2], (D, KV * HD))
    wo = w(ks[3], (D, D))
    w1 = w(ks[4], (D, HIDDEN))
    w2 = w(ks[5], (D, HIDDEN))
    w3 = w(ks[6], (HIDDEN, D))
    n1w = jnp.ones((1, D), jnp.float32)
    n2w = jnp.ones((1, D), jnp.float32)

    cos, sin = precompute_rope_params(HD, ROPE_BASE, T)
    cos = cos.astype(jnp.bfloat16)
    sin = sin.astype(jnp.bfloat16)

    params = (n1w, wq, wk, wv, wo, cos, sin, n2w, w1, w2, w3)

    x = jax.random.normal(ks[7], (B, T, D), jnp.float32)

    out = transformer_block(x, params)
    jax.block_until_ready(out)

    ref = reference_block(x, params)
    assert out.shape == (B, T, D) and out.dtype == jnp.float32
    assert jnp.allclose(out, ref, rtol=5e-2, atol=5e-2), "mismatch vs reference"

    print("KERNEL_OK")
</pallas_src>

<mosaic_0001>
module attributes {stable_mosaic.version = 11 : i64} {
  func.func @transformer_block_kernel(%arg0: memref<16x64xf32, #tpu.memory_space<vmem>>, %arg1: memref<1x64xf32, #tpu.memory_space<vmem>>, %arg2: memref<64x256xbf16, #tpu.memory_space<vmem>>, %arg3: memref<16x128xf32, #tpu.memory_space<vmem>>, %arg4: memref<16x128xf32, #tpu.memory_space<vmem>>, %arg5: memref<64x16xf32, #tpu.memory_space<vmem>>, %arg6: memref<64x64xbf16, #tpu.memory_space<vmem>>, %arg7: memref<1x64xf32, #tpu.memory_space<vmem>>, %arg8: memref<64x256xbf16, #tpu.memory_space<vmem>>, %arg9: memref<128x64xbf16, #tpu.memory_space<vmem>>, %arg10: memref<16x64xf32, #tpu.memory_space<vmem>>, %arg11: memref<16x64xbf16, #tpu.memory_space<vmem>>) attributes {dimension_semantics = [], scalar_prefetch = 0 : i64, scratch_operands = 1 : i64, tpu.core_type = #tpu.core_type<tc>} {
    %c0 = arith.constant 0 : index
    %c0_0 = arith.constant 0 : index
    %0 = vector.load %arg0[%c0, %c0_0] : memref<16x64xf32, #tpu.memory_space<vmem>>, vector<16x64xf32>
    %c0_1 = arith.constant 0 : index
    %c0_2 = arith.constant 0 : index
    %1 = vector.load %arg1[%c0_1, %c0_2] : memref<1x64xf32, #tpu.memory_space<vmem>>, vector<1x64xf32>
    %2 = arith.mulf %0, %0 : vector<16x64xf32>
    %cst = arith.constant dense<0.000000e+00> : vector<16xf32>
    %3 = vector.multi_reduction <add>, %2, %cst [1] : vector<16x64xf32> to vector<16xf32>
    %4 = vector.shape_cast %3 : vector<16xf32> to vector<16x1xf32>
    %cst_3 = arith.constant 6.400000e+01 : f32
    %5 = vector.broadcast %cst_3 : f32 to vector<16x1xf32>
    %6 = arith.divf %4, %5 : vector<16x1xf32>
    %cst_4 = arith.constant 9.99999974E-6 : f32
    %7 = vector.broadcast %cst_4 : f32 to vector<16x1xf32>
    %8 = arith.addf %6, %7 : vector<16x1xf32>
    %9 = math.rsqrt %8 : vector<16x1xf32>
    %10 = vector.broadcast %9 : vector<16x1xf32> to vector<16x64xf32>
    %11 = arith.mulf %0, %10 : vector<16x64xf32>
    %12 = vector.broadcast %1 : vector<1x64xf32> to vector<16x64xf32>
    %13 = arith.mulf %11, %12 : vector<16x64xf32>
    %14 = arith.truncf %13 : vector<16x64xf32> to vector<16x64xbf16>
    %c0_5 = arith.constant 0 : index
    %c0_6 = arith.constant 0 : index
    %15 = vector.load %arg2[%c0_5, %c0_6] : memref<64x256xbf16, #tpu.memory_space<vmem>>, vector<64x256xbf16>
    %cst_7 = arith.constant dense<0.000000e+00> : vector<16x256xf32>
    %16 = tpu.matmul %14, %15, %cst_7 {dimension_numbers = #tpu.dot_dimension_numbers<[1], [0], [0], [1], [0, 0, 1, 1], [], []>} : vector<16x64xbf16>, vector<64x256xbf16>, vector<16x256xf32> -> vector<16x256xf32>
    %17 = vector.extract_strided_slice %16 {offsets = [0, 0], sizes = [16, 128], strides = [1, 1]} : vector<16x256xf32> to vector<16x128xf32>
    %c0_8 = arith.constant 0 : index
    %c0_9 = arith.constant 0 : index
    %18 = vector.load %arg3[%c0_8, %c0_9] : memref<16x128xf32, #tpu.memory_space<vmem>>, vector<16x128xf32>
    %19 = arith.mulf %17, %18 : vector<16x128xf32>
    %20 = vector.extract_strided_slice %16 {offsets = [0, 128], sizes = [16, 128], strides = [1, 1]} : vector<16x256xf32> to vector<16x128xf32>
    %c0_10 = arith.constant 0 : index
    %c0_11 = arith.constant 0 : index
    %21 = vector.load %arg4[%c0_10, %c0_11] : memref<16x128xf32, #tpu.memory_space<vmem>>, vector<16x128xf32>
    %22 = arith.mulf %20, %21 : vector<16x128xf32>
    %23 = arith.addf %19, %22 : vector<16x128xf32>
    %24 = vector.extract_strided_slice %23 {offsets = [0, 0], sizes = [16, 64], strides = [1, 1]} : vector<16x128xf32> to vector<16x64xf32>
    %25 = arith.truncf %24 : vector<16x64xf32> to vector<16x64xbf16>
    %26 = vector.extract_strided_slice %23 {offsets = [0, 64], sizes = [16, 32], strides = [1, 1]} : vector<16x128xf32> to vector<16x32xf32>
    %27 = arith.truncf %26 : vector<16x32xf32> to vector<16x32xbf16>
    %28 = vector.extract_strided_slice %23 {offsets = [0, 96], sizes = [16, 32], strides = [1, 1]} : vector<16x128xf32> to vector<16x32xf32>
    %29 = arith.truncf %28 : vector<16x32xf32> to vector<16x32xbf16>
    %30 = vector.extract_strided_slice %25 {offsets = [0, 0], sizes = [16, 16], strides = [1, 1]} : vector<16x64xbf16> to vector<16x16xbf16>
    %31 = vector.extract_strided_slice %27 {offsets = [0, 0], sizes = [16, 16], strides = [1, 1]} : vector<16x32xbf16> to vector<16x16xbf16>
    %cst_12 = arith.constant dense<0.000000e+00> : vector<16x16xf32>
    %32 = tpu.matmul %30, %31, %cst_12 {dimension_numbers = #tpu.dot_dimension_numbers<[1], [1], [0], [0], [0, 0, 1, 0], [], []>} : vector<16x16xbf16>, vector<16x16xbf16>, vector<16x16xf32> -> vector<16x16xf32>
    %33 = vector.extract_strided_slice %25 {offsets = [0, 16], sizes = [16, 16], strides = [1, 1]} : vector<16x64xbf16> to vector<16x16xbf16>
    %34 = vector.extract_strided_slice %27 {offsets = [0, 0], sizes = [16, 16], strides = [1, 1]} : vector<16x32xbf16> to vector<16x16xbf16>
    %cst_13 = arith.constant dense<0.000000e+00> : vector<16x16xf32>
    %35 = tpu.matmul %33, %34, %cst_13 {dimension_numbers = #tpu.dot_dimension_numbers<[1], [1], [0], [0], [0, 0, 1, 0], [], []>} : vector<16x16xbf16>, vector<16x16xbf16>, vector<16x16xf32> -> vector<16x16xf32>
    %36 = vector.extract_strided_slice %25 {offsets = [0, 32], sizes = [16, 16], strides = [1, 1]} : vector<16x64xbf16> to vector<16x16xbf16>
    %37 = vector.extract_strided_slice %27 {offsets = [0, 16], sizes = [16, 16], strides = [1, 1]} : vector<16x32xbf16> to vector<16x16xbf16>
    %cst_14 = arith.constant dense<0.000000e+00> : vector<16x16xf32>
    %38 = tpu.matmul %36, %37, %cst_14 {dimension_numbers = #tpu.dot_dimension_numbers<[1], [1], [0], [0], [0, 0, 1, 0], [], []>} : vector<16x16xbf16>, vector<16x16xbf16>, vector<16x16xf32> -> vector<16x16xf32>
    %39 = vector.extract_strided_slice %25 {offsets = [0, 48], sizes = [16, 16], strides = [1, 1]} : vector<16x64xbf16> to vector<16x16xbf16>
    %40 = vector.extract_strided_slice %27 {offsets = [0, 16], sizes = [16, 16], strides = [1, 1]} : vector<16x32xbf16> to vector<16x16xbf16>
    %cst_15 = arith.constant dense<0.000000e+00> : vector<16x16xf32>
    %41 = tpu.matmul %39, %40, %cst_15 {dimension_numbers = #tpu.dot_dimension_numbers<[1], [1], [0], [0], [0, 0, 1, 0], [], []>} : vector<16x16xbf16>, vector<16x16xbf16>, vector<16x16xf32> -> vector<16x16xf32>
    %42 = tpu.concatenate %32, %35, %38, %41 in 0 : vector<16x16xf32>, vector<16x16xf32>, vector<16x16xf32>, vector<16x16xf32> -> vector<64x16xf32>
    %c0_16 = arith.constant 0 : index
    %c0_17 = arith.constant 0 : index
    %43 = vector.load %arg5[%c0_16, %c0_17] : memref<64x16xf32, #tpu.memory_space<vmem>>, vector<64x16xf32>
    %44 = arith.addf %42, %43 : vector<64x16xf32>
    %cst_18 = arith.constant dense<0xFF800000> : vector<64xf32>
    %45 = vector.multi_reduction <maximumf>, %44, %cst_18 [1] : vector<64x16xf32> to vector<64xf32>
    %46 = vector.shape_cast %45 : vector<64xf32> to vector<64x1xf32>
    %47 = vector.broadcast %46 : vector<64x1xf32> to vector<64x16xf32>
    %48 = arith.subf %44, %47 : vector<64x16xf32>
    %49 = math.exp %48 : vector<64x16xf32>
    %cst_19 = arith.constant dense<0.000000e+00> : vector<64xf32>
    %50 = vector.multi_reduction <add>, %49, %cst_19 [1] : vector<64x16xf32> to vector<64xf32>
    %51 = vector.shape_cast %50 : vector<64xf32> to vector<64x1xf32>
    %52 = tpu.reciprocal %51 {approx = true} : vector<64x1xf32> -> vector<64x1xf32>
    %53 = vector.broadcast %52 : vector<64x1xf32> to vector<64x16xf32>
    %54 = arith.mulf %49, %53 : vector<64x16xf32>
    %55 = arith.truncf %54 : vector<64x16xf32> to vector<64x16xbf16>
    %56 = vector.extract_strided_slice %29 {offsets = [0, 0], sizes = [16, 16], strides = [1, 1]} : vector<16x32xbf16> to vector<16x16xbf16>
    %57 = vector.extract_strided_slice %55 {offsets = [0, 0], sizes = [16, 16], strides = [1, 1]} : vector<64x16xbf16> to vector<16x16xbf16>
    %cst_20 = arith.constant dense<0.000000e+00> : vector<16x16xf32>
    %58 = tpu.matmul %57, %56, %cst_20 {dimension_numbers = #tpu.dot_dimension_numbers<[1], [0], [0], [1], [0, 0, 1, 1], [], []>} : vector<16x16xbf16>, vector<16x16xbf16>, vector<16x16xf32> -> vector<16x16xf32>
    %59 = arith.truncf %58 : vector<16x16xf32> to vector<16x16xbf16>
    %c0_21 = arith.constant 0 : index
    %c0_22 = arith.constant 0 : index
    %60 = vector.load %arg11[%c0_21, %c0_22] : memref<16x64xbf16, #tpu.memory_space<vmem>>, vector<16x16xbf16>
    tpu.vector_store %arg11[%c0_21, %c0_22], %59 {strides = array<i32>} : memref<16x64xbf16, #tpu.memory_space<vmem>>, vector<16x16xbf16>,
    %61 = vector.extract_strided_slice %29 {offsets = [0, 0], sizes = [16, 16], strides = [1, 1]} : vector<16x32xbf16> to vector<16x16xbf16>
    %62 = vector.extract_strided_slice %55 {offsets = [16, 0], sizes = [16, 16], strides = [1, 1]} : vector<64x16xbf16> to vector<16x16xbf16>
    %cst_23 = arith.constant dense<0.000000e+00> : vector<16x16xf32>
    %63 = tpu.matmul %62, %61, %cst_23 {dimension_numbers = #tpu.dot_dimension_numbers<[1], [0], [0], [1], [0, 0, 1, 1], [], []>} : vector<16x16xbf16>, vector<16x16xbf16>, vector<16x16xf32> -> vector<16x16xf32>
    %64 = arith.truncf %63 : vector<16x16xf32> to vector<16x16xbf16>
    %c0_24 = arith.constant 0 : index
    %c16 = arith.constant 16 : index
    %65 = vector.load %arg11[%c0_24, %c16] : memref<16x64xbf16, #tpu.memory_space<vmem>>, vector<16x16xbf16>
    tpu.vector_store %arg11[%c0_24, %c16], %64 {strides = array<i32>} : memref<16x64xbf16, #tpu.memory_space<vmem>>, vector<16x16xbf16>,
    %66 = vector.extract_strided_slice %29 {offsets = [0, 16], sizes = [16, 16], strides = [1, 1]} : vector<16x32xbf16> to vector<16x16xbf16>
    %67 = vector.extract_strided_slice %55 {offsets = [32, 0], sizes = [16, 16], strides = [1, 1]} : vector<64x16xbf16> to vector<16x16xbf16>
    %cst_25 = arith.constant dense<0.000000e+00> : vector<16x16xf32>
    %68 = tpu.matmul %67, %66, %cst_25 {dimension_numbers = #tpu.dot_dimension_numbers<[1], [0], [0], [1], [0, 0, 1, 1], [], []>} : vector<16x16xbf16>, vector<16x16xbf16>, vector<16x16xf32> -> vector<16x16xf32>
    %69 = arith.truncf %68 : vector<16x16xf32> to vector<16x16xbf16>
    %c0_26 = arith.constant 0 : index
    %c32 = arith.constant 32 : index
    %70 = vector.load %arg11[%c0_26, %c32] : memref<16x64xbf16, #tpu.memory_space<vmem>>, vector<16x16xbf16>
    tpu.vector_store %arg11[%c0_26, %c32], %69 {strides = array<i32>} : memref<16x64xbf16, #tpu.memory_space<vmem>>, vector<16x16xbf16>,
    %71 = vector.extract_strided_slice %29 {offsets = [0, 16], sizes = [16, 16], strides = [1, 1]} : vector<16x32xbf16> to vector<16x16xbf16>
    %72 = vector.extract_strided_slice %55 {offsets = [48, 0], sizes = [16, 16], strides = [1, 1]} : vector<64x16xbf16> to vector<16x16xbf16>
    %cst_27 = arith.constant dense<0.000000e+00> : vector<16x16xf32>
    %73 = tpu.matmul %72, %71, %cst_27 {dimension_numbers = #tpu.dot_dimension_numbers<[1], [0], [0], [1], [0, 0, 1, 1], [], []>} : vector<16x16xbf16>, vector<16x16xbf16>, vector<16x16xf32> -> vector<16x16xf32>
    %74 = arith.truncf %73 : vector<16x16xf32> to vector<16x16xbf16>
    %c0_28 = arith.constant 0 : index
    %c48 = arith.constant 48 : index
    %75 = vector.load %arg11[%c0_28, %c48] : memref<16x64xbf16, #tpu.memory_space<vmem>>, vector<16x16xbf16>
    tpu.vector_store %arg11[%c0_28, %c48], %74 {strides = array<i32>} : memref<16x64xbf16, #tpu.memory_space<vmem>>, vector<16x16xbf16>,
    %c0_29 = arith.constant 0 : index
    %c0_30 = arith.constant 0 : index
    %76 = vector.load %arg11[%c0_29, %c0_30] : memref<16x64xbf16, #tpu.memory_space<vmem>>, vector<16x64xbf16>
    %c0_31 = arith.constant 0 : index
    %c0_32 = arith.constant 0 : index
    %77 = vector.load %arg6[%c0_31, %c0_32] : memref<64x64xbf16, #tpu.memory_space<vmem>>, vector<64x64xbf16>
    %cst_33 = arith.constant dense<0.000000e+00> : vector<16x64xf32>
    %78 = tpu.matmul %76, %77, %cst_33 {dimension_numbers = #tpu.dot_dimension_numbers<[1], [0], [0], [1], [0, 0, 1, 1], [], []>} : vector<16x64xbf16>, vector<64x64xbf16>, vector<16x64xf32> -> vector<16x64xf32>
    %79 = arith.addf %0, %78 : vector<16x64xf32>
    %c0_34 = arith.constant 0 : index
    %c0_35 = arith.constant 0 : index
    %80 = vector.load %arg7[%c0_34, %c0_35] : memref<1x64xf32, #tpu.memory_space<vmem>>, vector<1x64xf32>
    %81 = arith.mulf %79, %79 : vector<16x64xf32>
    %cst_36 = arith.constant dense<0.000000e+00> : vector<16xf32>
    %82 = vector.multi_reduction <add>, %81, %cst_36 [1] : vector<16x64xf32> to vector<16xf32>
    %83 = vector.shape_cast %82 : vector<16xf32> to vector<16x1xf32>
    %cst_37 = arith.constant 6.400000e+01 : f32
    %84 = vector.broadcast %cst_37 : f32 to vector<16x1xf32>
    %85 = arith.divf %83, %84 : vector<16x1xf32>
    %cst_38 = arith.constant 9.99999974E-6 : f32
    %86 = vector.broadcast %cst_38 : f32 to vector<16x1xf32>
    %87 = arith.addf %85, %86 : vector<16x1xf32>
    %88 = math.rsqrt %87 : vector<16x1xf32>
    %89 = vector.broadcast %88 : vector<16x1xf32> to vector<16x64xf32>
    %90 = arith.mulf %79, %89 : vector<16x64xf32>
    %91 = vector.broadcast %80 : vector<1x64xf32> to vector<16x64xf32>
    %92 = arith.mulf %90, %91 : vector<16x64xf32>
    %93 = arith.truncf %92 : vector<16x64xf32> to vector<16x64xbf16>
    %c0_39 = arith.constant 0 : index
    %c0_40 = arith.constant 0 : index
    %94 = vector.load %arg8[%c0_39, %c0_40] : memref<64x256xbf16, #tpu.memory_space<vmem>>, vector<64x256xbf16>
    %cst_41 = arith.constant dense<0.000000e+00> : vector<16x256xf32>
    %95 = tpu.matmul %93, %94, %cst_41 {dimension_numbers = #tpu.dot_dimension_numbers<[1], [0], [0], [1], [0, 0, 1, 1], [], []>} : vector<16x64xbf16>, vector<64x256xbf16>, vector<16x256xf32> -> vector<16x256xf32>
    %96 = vector.extract_strided_slice %95 {offsets = [0, 0], sizes = [16, 128], strides = [1, 1]} : vector<16x256xf32> to vector<16x128xf32>
    %97 = vector.extract_strided_slice %95 {offsets = [0, 128], sizes = [16, 128], strides = [1, 1]} : vector<16x256xf32> to vector<16x128xf32>
    %98 = arith.negf %96 : vector<16x128xf32>
    %99 = math.exp %98 : vector<16x128xf32>
    %cst_42 = arith.constant 1.000000e+00 : f32
    %100 = vector.broadcast %cst_42 : f32 to vector<16x128xf32>
    %101 = arith.addf %100, %99 : vector<16x128xf32>
    %102 = arith.divf %100, %101 : vector<16x128xf32>
    %103 = arith.mulf %96, %102 : vector<16x128xf32>
    %104 = arith.mulf %103, %97 : vector<16x128xf32>
    %105 = arith.truncf %104 : vector<16x128xf32> to vector<16x128xbf16>
    %c0_43 = arith.constant 0 : index
    %c0_44 = arith.constant 0 : index
    %106 = vector.load %arg9[%c0_43, %c0_44] : memref<128x64xbf16, #tpu.memory_space<vmem>>, vector<128x64xbf16>
    %cst_45 = arith.constant dense<0.000000e+00> : vector<16x64xf32>
    %107 = tpu.matmul %105, %106, %cst_45 {dimension_numbers = #tpu.dot_dimension_numbers<[1], [0], [0], [1], [0, 0, 1, 1], [], []>} : vector<16x128xbf16>, vector<128x64xbf16>, vector<16x64xf32> -> vector<16x64xf32>
    %108 = arith.addf %79, %107 : vector<16x64xf32>
    %c0_46 = arith.constant 0 : index
    %c0_47 = arith.constant 0 : index
    %109 = vector.load %arg10[%c0_46, %c0_47] : memref<16x64xf32, #tpu.memory_space<vmem>>, vector<16x64xf32>
    tpu.vector_store %arg10[%c0_46, %c0_47], %108 {strides = array<i32>} : memref<16x64xf32, #tpu.memory_space<vmem>>, vector<16x64xf32>,
    return
  }
}

</mosaic_0001>

<llo_original>
// kernel: tile.33
$region0: #{tile.33}
  #allocation0 [shape = 's32[1]{0}', space=sflag, size = 0x4, scoped, tag = 'scoped memory for tile.33']
  %s0 = inlined_call_operand.vmem [shape: bf16[8,16], index: 0, kind: input, shape index: {}]
  %s1 = inlined_call_operand.vmem [shape: f32[2,8,2,16], index: 1, kind: output, shape index: {}]
  // Predicated region
  $region2: #{tile.33} parent=0 // pred_check
    _
  $region3: #{tile.33} parent=0 // pred_check_branch
    %3 = sbr.rel (0) target = $region5
  $region4: #{tile.33} parent=0 // pred_region
    _
  $region5: #{tile.33} parent=0 // pred_fallthru
    _
  %v4 = vld [vmem:[%s0] ss:$0 sm:$0xff]
  %v5 = vunpack.i.l.bf16 %v4
  %v7 = vunpack.i.h.bf16 %v4
  %9 = vst [vmem:[%s1] sm:$0x3] %v5
  %s10 = scalar_lea.vmem %s1, 16
  %11 = vst [vmem:[%s10] sm:$0x3] %v5
  %v12 = vld [vmem:[%s0] ss:$0 sm:$0xff]
  %v13 = vunpack.i.l.bf16 %v12
  %v15 = vunpack.i.h.bf16 %v12
  %s17 = scalar_lea.vmem %s1, 2
  %18 = vst [vmem:[%s17] sm:$0x3] %v15
  %s19 = scalar_lea.vmem %s1, 18
  %20 = vst [vmem:[%s19] sm:$0x3] %v15
  %s21 = scalar_lea.vmem %s0, 1
  %v22 = vld [vmem:[%s21] ss:$0 sm:$0xff]
  %v23 = vunpack.i.l.bf16 %v22
  %v25 = vunpack.i.h.bf16 %v22
  %s27 = scalar_lea.vmem %s1, 4
  %28 = vst [vmem:[%s27] sm:$0x3] %v23
  %s29 = scalar_lea.vmem %s1, 20
  %30 = vst [vmem:[%s29] sm:$0x3] %v23
  %s31 = scalar_lea.vmem %s0, 1
  %v32 = vld [vmem:[%s31] ss:$0 sm:$0xff]
  %v33 = vunpack.i.l.bf16 %v32
  %v35 = vunpack.i.h.bf16 %v32
  %s37 = scalar_lea.vmem %s1, 6
  %38 = vst [vmem:[%s37] sm:$0x3] %v35
  %s39 = scalar_lea.vmem %s1, 22
  %40 = vst [vmem:[%s39] sm:$0x3] %v35
  %s41 = scalar_lea.vmem %s0, 2
  %v42 = vld [vmem:[%s41] ss:$0 sm:$0xff]
  %v43 = vunpack.i.l.bf16 %v42
  %v45 = vunpack.i.h.bf16 %v42
  %s47 = scalar_lea.vmem %s1, 8
  %48 = vst [vmem:[%s47] sm:$0x3] %v43
  %s49 = scalar_lea.vmem %s1, 24
  %50 = vst [vmem:[%s49] sm:$0x3] %v43
  %s51 = scalar_lea.vmem %s0, 2
  %v52 = vld [vmem:[%s51] ss:$0 sm:$0xff]
  %v53 = vunpack.i.l.bf16 %v52
  %v55 = vunpack.i.h.bf16 %v52
  %s57 = scalar_lea.vmem %s1, 10
  %58 = vst [vmem:[%s57] sm:$0x3] %v55
  %s59 = scalar_lea.vmem %s1, 26
  %60 = vst [vmem:[%s59] sm:$0x3] %v55
  %s61 = scalar_lea.vmem %s0, 3
  %v62 = vld [vmem:[%s61] ss:$0 sm:$0xff]
  %v63 = vunpack.i.l.bf16 %v62
  %v65 = vunpack.i.h.bf16 %v62
  %s67 = scalar_lea.vmem %s1, 12
  %68 = vst [vmem:[%s67] sm:$0x3] %v63
  %s69 = scalar_lea.vmem %s1, 28
  %70 = vst [vmem:[%s69] sm:$0x3] %v63
  %s71 = scalar_lea.vmem %s0, 3
  %v72 = vld [vmem:[%s71] ss:$0 sm:$0xff]
  %v73 = vunpack.i.l.bf16 %v72
  %v75 = vunpack.i.h.bf16 %v72
  %s77 = scalar_lea.vmem %s1, 14
  %78 = vst [vmem:[%s77] sm:$0x3] %v75
  %s79 = scalar_lea.vmem %s1, 30
  %80 = vst [vmem:[%s79] sm:$0x3] %v75

// kernel: tile.34
$region0: #{tile.34}
  %s0 = inlined_call_operand.vmem [shape: f32[2,8,2,16], index: 0, kind: input, shape index: {}]
  %s1 = inlined_call_operand.vmem [shape: f32[16,32], index: 1, kind: output, shape index: {}]
  $region1: #{tile.34} parent=0
    #allocation0 [shape = 'u8[65536]{0}', space=vmem, size = 0x10000, scoped, tag = 'scoped mem for input reshape']
    %s3 = ssub.s32 4, 1
    %s4 = scalar_lea.vmem %s0, 30
    %v5 = vld [vmem:[%s4] sm:%s3]
    %s6 = scalar_lea.vmem [#allocation0], 120
    %7 = vst [vmem:[%s6] sm:%s3] %v5
    %s8 = scalar_lea.vmem %s0, 28
    %v9 = vld [vmem:[%s8] sm:%s3]
    %s10 = scalar_lea.vmem [#allocation0], 112
    %11 = vst [vmem:[%s10] sm:%s3] %v9
    %s12 = scalar_lea.vmem %s0, 26
    %v13 = vld [vmem:[%s12] sm:%s3]
    %s14 = scalar_lea.vmem [#allocation0], 104
    %15 = vst [vmem:[%s14] sm:%s3] %v13
    %s16 = scalar_lea.vmem %s0, 24
    %v17 = vld [vmem:[%s16] sm:%s3]
    %s18 = scalar_lea.vmem [#allocation0], 96
    %19 = vst [vmem:[%s18] sm:%s3] %v17
    %s20 = scalar_lea.vmem %s0, 22
    %v21 = vld [vmem:[%s20] sm:%s3]
    %s22 = scalar_lea.vmem [#allocation0], 88
    %23 = vst [vmem:[%s22] sm:%s3] %v21
    %s24 = scalar_lea.vmem %s0, 20
    %v25 = vld [vmem:[%s24] sm:%s3]
    %s26 = scalar_lea.vmem [#allocation0], 80
    %27 = vst [vmem:[%s26] sm:%s3] %v25
    %s28 = scalar_lea.vmem %s0, 18
    %v29 = vld [vmem:[%s28] sm:%s3]
    %s30 = scalar_lea.vmem [#allocation0], 72
    %31 = vst [vmem:[%s30] sm:%s3] %v29
    %s32 = scalar_lea.vmem %s0, 16
    %v33 = vld [vmem:[%s32] sm:%s3]
    %s34 = scalar_lea.vmem [#allocation0], 64
    %35 = vst [vmem:[%s34] sm:%s3] %v33
    %s36 = scalar_lea.vmem %s0, 14
    %v37 = vld [vmem:[%s36] sm:%s3]
    %s38 = scalar_lea.vmem [#allocation0], 56
    %39 = vst [vmem:[%s38] sm:%s3] %v37
    %s40 = scalar_lea.vmem %s0, 12
    %v41 = vld [vmem:[%s40] sm:%s3]
    %s42 = scalar_lea.vmem [#allocation0], 48
    %43 = vst [vmem:[%s42] sm:%s3] %v41
    %s44 = scalar_lea.vmem %s0, 10
    %v45 = vld [vmem:[%s44] sm:%s3]
    %s46 = scalar_lea.vmem [#allocation0], 40
    %47 = vst [vmem:[%s46] sm:%s3] %v45
    %s48 = scalar_lea.vmem %s0, 8
    %v49 = vld [vmem:[%s48] sm:%s3]
    %s50 = scalar_lea.vmem [#allocation0], 32
    %51 = vst [vmem:[%s50] sm:%s3] %v49
    %s52 = scalar_lea.vmem %s0, 6
    %v53 = vld [vmem:[%s52] sm:%s3]
    %s54 = scalar_lea.vmem [#allocation0], 24
    %55 = vst [vmem:[%s54] sm:%s3] %v53
    %s56 = scalar_lea.vmem %s0, 4
    %v57 = vld [vmem:[%s56] sm:%s3]
    %s58 = scalar_lea.vmem [#allocation0], 16
    %59 = vst [vmem:[%s58] sm:%s3] %v57
    %s60 = scalar_lea.vmem %s0, 2
    %v61 = vld [vmem:[%s60] sm:%s3]
    %s62 = scalar_lea.vmem [#allocation0], 8
    %63 = vst [vmem:[%s62] sm:%s3] %v61
    %v64 = vld [vmem:[%s0] sm:%s3]
    %65 = vst [vmem:[#allocation0] sm:%s3] %v64
    %v66 = vld [vmem:[#allocation0] ss:$8 sm:$0xf]
    %v67 = vld [vmem:[#allocation0] ss:$8 sm:$0xf0]
    %vm68 = vcmask 1047556
    %v69 = vsel %vm68, %v67, %v66
    %vm70 = vcmask 130048
    %71 = vst.msk [vmem:[%s1] sm:$0xff] %vm70, %v69
    %s72 = scalar_lea.vmem [#allocation0], 64
    %v73 = vld [vmem:[%s72] ss:$8 sm:$0xf]
    %s74 = scalar_lea.vmem [#allocation0], 64
    %v75 = vld [vmem:[%s74] ss:$8 sm:$0xf0]
    %vm76 = vcmask 1047556
    %v77 = vsel %vm76, %v75, %v73
    %vm78 = vcmask 130048
    %s79 = scalar_lea.vmem %s1, 8
    %80 = vst.msk [vmem:[%s79] sm:$0xff] %vm78, %v77
    %s81 = scalar_lea.vmem [#allocation0], 1
    %v82 = vld [vmem:[%s81] ss:$8 sm:$0xf]
    %s83 = scalar_lea.vmem [#allocation0], 1
    %v84 = vld [vmem:[%s83] ss:$8 sm:$0xf0]
    %vm85 = vcmask 1047556
    %v86 = vsel %vm85, %v84, %v82
    %87 = vrot.lane.b32.xlu0 %v86, 16
    %v88 = vpop.permute.xlu0 %87
    %vm89 = vcmask 261248
    %90 = vst.msk [vmem:[%s1] sm:$0xff] %vm89, %v88
    %s91 = scalar_lea.vmem [#allocation0], 65
    %v92 = vld [vmem:[%s91] ss:$8 sm:$0xf]
    %s93 = scalar_lea.vmem [#allocation0], 65
    %v94 = vld [vmem:[%s93] ss:$8 sm:$0xf0]
    %vm95 = vcmask 1047556
    %v96 = vsel %vm95, %v94, %v92
    %97 = vrot.lane.b32.xlu0 %v96, 16
    %v98 = vpop.permute.xlu0 %97
    %vm99 = vcmask 261248
    %s100 = scalar_lea.vmem %s1, 8
    %101 = vst.msk [vmem:[%s100] sm:$0xff] %vm99, %v98

// kernel: transformer_block.1
$region0: #{transformer_block.1}
  #allocation0 [shape = 'u32[]', space=smem, size = 0x4, offset = 0x4, fixed_abs, tag = 'smem constant byte address 0x4 - core index']
  #allocation1 [shape = 'u32[72,128]{1,0:T(1,128)}', space=vmem, size = 0x9000, scoped, tag = 'internal scratch']
  #allocation2 [shape = 'bf16[16,64]{1,0:T(8,128)(2,1)}', space=vmem, size = 0x1000, scoped, tag = 'scratch operand']
  %s0 = inlined_call_operand.vmem [shape: f32[16,64], index: 0, kind: input, shape index: {}]
  %s1 = inlined_call_operand.vmem [shape: f32[1,64], index: 1, kind: input, shape index: {}]
  %s2 = inlined_call_operand.vmem [shape: bf16[64,256], index: 2, kind: input, shape index: {}]
  %s3 = inlined_call_operand.vmem [shape: f32[16,128], index: 3, kind: input, shape index: {}]
  %s4 = inlined_call_operand.vmem [shape: f32[16,128], index: 4, kind: input, shape index: {}]
  %s5 = inlined_call_operand.vmem [shape: f32[64,16], index: 5, kind: input, shape index: {}]
  %s6 = inlined_call_operand.vmem [shape: bf16[64,64], index: 6, kind: input, shape index: {}]
  %s7 = inlined_call_operand.vmem [shape: f32[1,64], index: 7, kind: input, shape index: {}]
  %s8 = inlined_call_operand.vmem [shape: bf16[64,256], index: 8, kind: input, shape index: {}]
  %s9 = inlined_call_operand.vmem [shape: bf16[128,64], index: 9, kind: input, shape index: {}]
  %s10 = inlined_call_operand.hbm [shape: f32[16,64], index: 10, kind: output, shape index: {}]
  %s11 = sld [smem:[#allocation0]]
  $region50: #{transformer_block.1} parent=0
    _
  %s13 = ssub.s32 1, %s11
  %s14 = scalar_select 0, %s13, %s11
  $region1: #{transformer_block.1} parent=0
    #allocation3 [shape = 'u8[8192]{0}', space=vmem, size = 0x2000, scoped, tag = 'output window, operand 0, single buffered']
    #allocation4 [shape = 's32[1]{0}', space=sflag, size = 0x4, scoped, tag = 'scoped memory for transformer_block.1']
    %15 = vsyncpa [#allocation4], 0
    // Predicated region
    $region2: #{transformer_block.1} parent=1 // pred_check
      _
    $region3: #{transformer_block.1} parent=1 // pred_check_branch
      %17 = sbr.rel (0) target = $region5
    $region4: #{transformer_block.1} parent=1 // pred_region
      _
    $region5: #{transformer_block.1} parent=1 // pred_fallthru
      _
    // Predicated region
    $region6: #{transformer_block.1} parent=1 // pred_check
      _
    $region7: #{transformer_block.1} parent=1 // pred_check_branch
      %19 = sbr.rel (0) target = $region9
    $region8: #{transformer_block.1} parent=1 // pred_region
      _
    $region9: #{transformer_block.1} parent=1 // pred_fallthru
      _
    // Predicated region
    $region10: #{transformer_block.1} parent=1 // pred_check
      _
    $region11: #{transformer_block.1} parent=1 // pred_check_branch
      %21 = sbr.rel (0) target = $region13
    $region12: #{transformer_block.1} parent=1 // pred_region
      _
    $region13: #{transformer_block.1} parent=1 // pred_fallthru
      _
    // Predicated region
    $region14: #{transformer_block.1} parent=1 // pred_check
      _
    $region15: #{transformer_block.1} parent=1 // pred_check_branch
      %23 = sbr.rel (0) target = $region17
    $region16: #{transformer_block.1} parent=1 // pred_region
      _
    $region17: #{transformer_block.1} parent=1 // pred_fallthru
      _
    // Predicated region
    $region18: #{transformer_block.1} parent=1 // pred_check
      _
    $region19: #{transformer_block.1} parent=1 // pred_check_branch
      %25 = sbr.rel (0) target = $region21
    $region20: #{transformer_block.1} parent=1 // pred_region
      _
    $region21: #{transformer_block.1} parent=1 // pred_fallthru
      _
    // Predicated region
    $region22: #{transformer_block.1} parent=1 // pred_check
      _
    $region23: #{transformer_block.1} parent=1 // pred_check_branch
      %27 = sbr.rel (0) target = $region25
    $region24: #{transformer_block.1} parent=1 // pred_region
      _
    $region25: #{transformer_block.1} parent=1 // pred_fallthru
      _
    // Predicated region
    $region26: #{transformer_block.1} parent=1 // pred_check
      _
    $region27: #{transformer_block.1} parent=1 // pred_check_branch
      %29 = sbr.rel (0) target = $region29
    $region28: #{transformer_block.1} parent=1 // pred_region
      _
    $region29: #{transformer_block.1} parent=1 // pred_fallthru
      _
    // Predicated region
    $region30: #{transformer_block.1} parent=1 // pred_check
      _
    $region31: #{transformer_block.1} parent=1 // pred_check_branch
      %31 = sbr.rel (0) target = $region33
    $region32: #{transformer_block.1} parent=1 // pred_region
      _
    $region33: #{transformer_block.1} parent=1 // pred_fallthru
      _
    // Predicated region
    $region34: #{transformer_block.1} parent=1 // pred_check
      _
    $region35: #{transformer_block.1} parent=1 // pred_check_branch
      %33 = sbr.rel (0) target = $region37
    $region36: #{transformer_block.1} parent=1 // pred_region
      _
    $region37: #{transformer_block.1} parent=1 // pred_fallthru
      _
    // Predicated region
    $region38: #{transformer_block.1} parent=1 // pred_check
      _
    $region39: #{transformer_block.1} parent=1 // pred_check_branch
      %35 = sbr.rel (0) target = $region41
    $region40: #{transformer_block.1} parent=1 // pred_region
      _
    $region41: #{transformer_block.1} parent=1 // pred_fallthru
      _
    %v37 = vld [vmem:[%s0] sm:$0xff]
    %v38 = vld [vmem:[%s0 + $0x8] sm:$0xff]
    %v39 = vld [vmem:[%s1] sm:$0x1]
    %v40 = vmul.f32 %v37, %v37
    %v41 = vmul.f32 %v38, %v38
    %vm42 = vcmask 523264
    %v43 = vsel %vm42, %v40, 0.0
    %44 = vadd.xlane.f32.xlu0 %v43
    %v45 = vpop.xlane.xlu0 %44
    %v46 = vsel %vm42, %v41, 0.0
    %47 = vadd.xlane.f32.xlu0 %v46
    %v48 = vpop.xlane.xlu0 %47
    %v49 = vrcp.pop 64.0
    %v50 = vmul.f32 64.0, %v49
    %v51 = vsub.f32 1.0, %v50
    %v52 = vmul.f32 %v49, %v51
    %v53 = vadd.f32 %v49, %v52
    %vm54 = vweird.f32 %v49
    %v55 = vsel %vm54, %v49, %v53
    %v56 = vmul.f32 %v45, %v55
    %v57 = vmul.f32 %v48, %v55
    %v58 = vadd.f32 %v56, 1e-05
    %v59 = vadd.f32 %v57, 1e-05
    %v60 = vrsqrt.pop %v58
    %v61 = vmul.f32 %v60, %v58
    %v62 = vmul.f32 %v61, %v60
    %v63 = vmul.f32 0.5, %v62
    %v64 = vsub.f32 1.5, %v63
    %v65 = vmul.f32 %v60, %v64
    %vm66 = vweird.f32 %v58
    %vm67 = vweird.f32 %v60
    %vm68 = vmor %vm66, %vm67
    %v69 = vsel %vm68, %v60, %v65
    %v70 = vrsqrt.pop %v59
    %v71 = vmul.f32 %v70, %v59
    %v72 = vmul.f32 %v71, %v70
    %v73 = vmul.f32 0.5, %v72
    %v74 = vsub.f32 1.5, %v73
    %v75 = vmul.f32 %v70, %v74
    %vm76 = vweird.f32 %v59
    %vm77 = vweird.f32 %v70
    %vm78 = vmor %vm76, %vm77
    %v79 = vsel %vm78, %v70, %v75
    %v80 = vmul.f32 %v37, %v69
    %v81 = vmul.f32 %v38, %v79
    %v83 = vperm.slane %v39, 0
    %v85 = vmul.f32 %v80, %v83
    %v86 = vmul.f32 %v81, %v83
    %v87 = vpack.c.bf16 %v86, %v85
    %v88 = vld [vmem:[%s2] sm:$0xff]
    %v89 = vld [vmem:[%s2 + $0x8] sm:$0xff]
    %v90 = vld [vmem:[%s2 + $0x10] sm:$0xff]
    %v91 = vld [vmem:[%s2 + $0x18] sm:$0xff]
    %v92 = vld [vmem:[%s2 + $0x20] sm:$0xff]
    %v93 = vld [vmem:[%s2 + $0x28] sm:$0xff]
    %v94 = vld [vmem:[%s2 + $0x30] sm:$0xff]
    %v95 = vld [vmem:[%s2 + $0x38] sm:$0xff]
    %v104 = vunpack.c.l.b16 %v88
    %v105 = vunpack.c.h.b16 %v88
    %v106 = vunpack.c.l.b16 %v89
    %v107 = vunpack.c.h.b16 %v89
    %v108 = vunpack.c.l.b16 %v90
    %v109 = vunpack.c.h.b16 %v90
    %v110 = vunpack.c.l.b16 %v91
    %v111 = vunpack.c.h.b16 %v91
    %v112 = vunpack.c.l.b16 %v92
    %v113 = vunpack.c.h.b16 %v92
    %v114 = vunpack.c.l.b16 %v93
    %v115 = vunpack.c.h.b16 %v93
    %v116 = vunpack.c.l.b16 %v94
    %v117 = vunpack.c.h.b16 %v94
    %v118 = vunpack.c.l.b16 %v95
    %v119 = vunpack.c.h.b16 %v95
    %v120 = vpack.c.b16 %v106, %v104
    %v121 = vpack.c.b16 %v107, %v105
    %v122 = vpack.c.b16 %v110, %v108
    %v123 = vpack.c.b16 %v111, %v109
    %v124 = vpack.c.b16 %v114, %v112
    %v125 = vpack.c.b16 %v115, %v113
    %v126 = vpack.c.b16 %v118, %v116
    %v127 = vpack.c.b16 %v119, %v117
    %v137 = vsel %vm42, %v87, 0
    %139 = vmatpush.bf16.msra.mxu0 0
    %140 = vmatpush.bf16.msra.mxu0 0
    %141 = vmatpush.bf16.msra.mxu0 0
    %142 = vmatpush.bf16.msra.mxu0 0
    %143 = vmatpush.bf16.msra.mxu0 %v126
    %144 = vmatpush.bf16.msra.mxu0 %v124
    %145 = vmatpush.bf16.msra.mxu0 %v122
    %146 = vmatpush.bf16.msra.mxu0 %v120
    %147 = vmatmul.bf16.gmra.mxu0 %v137
    %v148 = vpop.f32.mrf.mxu0
    %v149 = vadd.f32 0.0, %v148
    %v150 = vpop.f32.mrf.mxu0
    %v151 = vadd.f32 0.0, %v150
    %152 = vdwg.mxu0
    %153 = vmatpush.bf16.msra.mxu0 0
    %154 = vmatpush.bf16.msra.mxu0 0
    %155 = vmatpush.bf16.msra.mxu0 0
    %156 = vmatpush.bf16.msra.mxu0 0
    %157 = vmatpush.bf16.msra.mxu0 %v127
    %158 = vmatpush.bf16.msra.mxu0 %v125
    %159 = vmatpush.bf16.msra.mxu0 %v123
    %160 = vmatpush.bf16.msra.mxu0 %v121
    %161 = vmatmul.bf16.gmra.mxu0 %v137
    %v162 = vpop.f32.mrf.mxu0
    %v163 = vadd.f32 0.0, %v162
    %v164 = vpop.f32.mrf.mxu0
    %v165 = vadd.f32 0.0, %v164
    %166 = vdwg.mxu0
    %v167 = vld [vmem:[%s3] sm:$0xff]
    %v168 = vld [vmem:[%s3 + $0x8] sm:$0xff]
    %v169 = vmul.f32 %v149, %v167
    %v170 = vmul.f32 %v151, %v168
    %v171 = vld [vmem:[%s4] sm:$0xff]
    %v172 = vld [vmem:[%s4 + $0x8] sm:$0xff]
    %v173 = vmul.f32 %v163, %v171
    %v174 = vmul.f32 %v165, %v172
    %v175 = vadd.f32 %v169, %v173
    %v176 = vadd.f32 %v170, %v174
    %v177 = vpack.c.bf16 %v175, %v175
    %v178 = vpack.c.bf16 %v176, %v176
    %v181 = vunpack.c.l.b16 %v177
    %v182 = vunpack.c.l.b16 %v178
    %v183 = vpack.c.b16 %v182, %v181
    %184 = vrot.lane.b32.xlu0 %v183, 64
    %v185 = vpop.permute.xlu0 %184
    %vm186 = vcmask 130048
    %v188 = vsel %vm186, %v183, 0
    %v191 = vsel %vm186, %v185, 0
    %193 = vmatpush.bf16.xpose.msra.mxu0 0
    %194 = vmatpush.bf16.xpose.msra.mxu0 0
    %195 = vmatpush.bf16.xpose.msra.mxu0 0
    %196 = vmatpush.bf16.xpose.msra.mxu0 0
    %197 = vmatpush.bf16.xpose.msra.mxu0 0
    %198 = vmatpush.bf16.xpose.msra.mxu0 0
    %199 = vmatpush.bf16.xpose.msra.mxu0 0
    %200 = vmatpush.bf16.xpose.msra.mxu0 %v191
    %201 = vmatmul.bf16.gmra.mxu0 %v188
    %v202 = vpop.f32.mrf.mxu0
    %v203 = vadd.f32 0.0, %v202
    %v204 = vpop.f32.mrf.mxu0
    %v205 = vadd.f32 0.0, %v204
    %206 = vdwg.mxu0
    %207 = vrot.lane.b32.xlu0 %v183, 112
    %v208 = vpop.permute.xlu0 %207
    %v210 = vsel %vm186, %v208, 0
    %212 = vmatpush.bf16.xpose.msra.mxu0 0
    %213 = vmatpush.bf16.xpose.msra.mxu0 0
    %214 = vmatpush.bf16.xpose.msra.mxu0 0
    %215 = vmatpush.bf16.xpose.msra.mxu0 0
    %216 = vmatpush.bf16.xpose.msra.mxu0 0
    %217 = vmatpush.bf16.xpose.msra.mxu0 0
    %218 = vmatpush.bf16.xpose.msra.mxu0 0
    %219 = vmatpush.bf16.xpose.msra.mxu0 %v191
    %220 = vmatmul.bf16.gmra.mxu0 %v210
    %v221 = vpop.f32.mrf.mxu0
    %v222 = vadd.f32 0.0, %v221
    %v223 = vpop.f32.mrf.mxu0
    %v224 = vadd.f32 0.0, %v223
    %225 = vdwg.mxu0
    %226 = vrot.lane.b32.xlu0 %v183, 96
    %v227 = vpop.permute.xlu0 %226
    %228 = vrot.lane.b32.xlu0 %v183, 48
    %v229 = vpop.permute.xlu0 %228
    %v231 = vsel %vm186, %v227, 0
    %v234 = vsel %vm186, %v229, 0
    %236 = vmatpush.bf16.xpose.msra.mxu0 0
    %237 = vmatpush.bf16.xpose.msra.mxu0 0
    %238 = vmatpush.bf16.xpose.msra.mxu0 0
    %239 = vmatpush.bf16.xpose.msra.mxu0 0
    %240 = vmatpush.bf16.xpose.msra.mxu0 0
    %241 = vmatpush.bf16.xpose.msra.mxu0 0
    %242 = vmatpush.bf16.xpose.msra.mxu0 0
    %243 = vmatpush.bf16.xpose.msra.mxu0 %v234
    %244 = vmatmul.bf16.gmra.mxu0 %v231
    %v245 = vpop.f32.mrf.mxu0
    %v246 = vadd.f32 0.0, %v245
    %v247 = vpop.f32.mrf.mxu0
    %v248 = vadd.f32 0.0, %v247
    %249 = vdwg.mxu0
    %250 = vrot.lane.b32.xlu0 %v183, 80
    %v251 = vpop.permute.xlu0 %250
    %v253 = vsel %vm186, %v251, 0
    %255 = vmatpush.bf16.xpose.msra.mxu0 0
    %256 = vmatpush.bf16.xpose.msra.mxu0 0
    %257 = vmatpush.bf16.xpose.msra.mxu0 0
    %258 = vmatpush.bf16.xpose.msra.mxu0 0
    %259 = vmatpush.bf16.xpose.msra.mxu0 0
    %260 = vmatpush.bf16.xpose.msra.mxu0 0
    %261 = vmatpush.bf16.xpose.msra.mxu0 0
    %262 = vmatpush.bf16.xpose.msra.mxu0 %v234
    %263 = vmatmul.bf16.gmra.mxu0 %v253
    %v264 = vpop.f32.mrf.mxu0
    %v265 = vadd.f32 0.0, %v264
    %v266 = vpop.f32.mrf.mxu0
    %v267 = vadd.f32 0.0, %v266
    %268 = vdwg.mxu0
    %v269 = vld [vmem:[%s5] sm:$0xff]
    %v270 = vld [vmem:[%s5 + $0x8] sm:$0xff]
    %v271 = vld [vmem:[%s5 + $0x10] sm:$0xff]
    %v272 = vld [vmem:[%s5 + $0x18] sm:$0xff]
    %v273 = vld [vmem:[%s5 + $0x20] sm:$0xff]
    %v274 = vld [vmem:[%s5 + $0x28] sm:$0xff]
    %v275 = vld [vmem:[%s5 + $0x30] sm:$0xff]
    %v276 = vld [vmem:[%s5 + $0x38] sm:$0xff]
    %v277 = vadd.f32 %v203, %v269
    %v278 = vadd.f32 %v205, %v270
    %v279 = vadd.f32 %v222, %v271
    %v280 = vadd.f32 %v224, %v272
    %v281 = vadd.f32 %v246, %v273
    %v282 = vadd.f32 %v248, %v274
    %v283 = vadd.f32 %v265, %v275
    %v284 = vadd.f32 %v267, %v276
    %v285 = vsel %vm186, %v277, -inf
    %286 = vmax.xlane.f32.xlu0 %v285
    %v287 = vpop.xlane.xlu0 %286
    %v288 = vsel %vm186, %v278, -inf
    %289 = vmax.xlane.f32.xlu0 %v288
    %v290 = vpop.xlane.xlu0 %289
    %v291 = vsel %vm186, %v279, -inf
    %292 = vmax.xlane.f32.xlu0 %v291
    %v293 = vpop.xlane.xlu0 %292
    %v294 = vsel %vm186, %v280, -inf
    %295 = vmax.xlane.f32.xlu0 %v294
    %v296 = vpop.xlane.xlu0 %295
    %v297 = vsel %vm186, %v281, -inf
    %298 = vmax.xlane.f32.xlu0 %v297
    %v299 = vpop.xlane.xlu0 %298
    %v300 = vsel %vm186, %v282, -inf
    %301 = vmax.xlane.f32.xlu0 %v300
    %v302 = vpop.xlane.xlu0 %301
    %v303 = vsel %vm186, %v283, -inf
    %304 = vmax.xlane.f32.xlu0 %v303
    %v305 = vpop.xlane.xlu0 %304
    %v306 = vsel %vm186, %v284, -inf
    %307 = vmax.xlane.f32.xlu0 %v306
    %v308 = vpop.xlane.xlu0 %307
    %v309 = vsub.f32 %v277, %v287
    %v310 = vsub.f32 %v278, %v290
    %v311 = vsub.f32 %v279, %v293
    %v312 = vsub.f32 %v280, %v296
    %v313 = vsub.f32 %v281, %v299
    %v314 = vsub.f32 %v282, %v302
    %v315 = vsub.f32 %v283, %v305
    %v316 = vsub.f32 %v284, %v308
    %v317 = vmul.f32 %v309, 1.442695
    %v318 = vpow.pop %v317
    %v319 = vmul.f32 %v310, 1.442695
    %v320 = vpow.pop %v319
    %v321 = vmul.f32 %v311, 1.442695
    %v322 = vpow.pop %v321
    %v323 = vmul.f32 %v312, 1.442695
    %v324 = vpow.pop %v323
    %v325 = vmul.f32 %v313, 1.442695
    %v326 = vpow.pop %v325
    %v327 = vmul.f32 %v314, 1.442695
    %v328 = vpow.pop %v327
    %v329 = vmul.f32 %v315, 1.442695
    %v330 = vpow.pop %v329
    %v331 = vmul.f32 %v316, 1.442695
    %v332 = vpow.pop %v331
    %v333 = vsel %vm186, %v318, 0.0
    %334 = vadd.xlane.f32.xlu0 %v333
    %v335 = vpop.xlane.xlu0 %334
    %v336 = vsel %vm186, %v320, 0.0
    %337 = vadd.xlane.f32.xlu0 %v336
    %v338 = vpop.xlane.xlu0 %337
    %v339 = vsel %vm186, %v322, 0.0
    %340 = vadd.xlane.f32.xlu0 %v339
    %v341 = vpop.xlane.xlu0 %340
    %v342 = vsel %vm186, %v324, 0.0
    %343 = vadd.xlane.f32.xlu0 %v342
    %v344 = vpop.xlane.xlu0 %343
    %v345 = vsel %vm186, %v326, 0.0
    %346 = vadd.xlane.f32.xlu0 %v345
    %v347 = vpop.xlane.xlu0 %346
    %v348 = vsel %vm186, %v328, 0.0
    %349 = vadd.xlane.f32.xlu0 %v348
    %v350 = vpop.xlane.xlu0 %349
    %v351 = vsel %vm186, %v330, 0.0
    %352 = vadd.xlane.f32.xlu0 %v351
    %v353 = vpop.xlane.xlu0 %352
    %v354 = vsel %vm186, %v332, 0.0
    %355 = vadd.xlane.f32.xlu0 %v354
    %v356 = vpop.xlane.xlu0 %355
    %v357 = vrcp.pop %v335
    %v358 = vrcp.pop %v338
    %v359 = vrcp.pop %v341
    %v360 = vrcp.pop %v344
    %v361 = vrcp.pop %v347
    %v362 = vrcp.pop %v350
    %v363 = vrcp.pop %v353
    %v364 = vrcp.pop %v356
    %v365 = vmul.f32 %v318, %v357
    %v366 = vmul.f32 %v320, %v358
    %v367 = vmul.f32 %v322, %v359
    %v368 = vmul.f32 %v324, %v360
    %v369 = vmul.f32 %v326, %v361
    %v370 = vmul.f32 %v328, %v362
    %v371 = vmul.f32 %v330, %v363
    %v372 = vmul.f32 %v332, %v364
    %v373 = vpack.c.bf16 %v365, %v365
    %v374 = vpack.c.bf16 %v366, %v366
    %v375 = vpack.c.bf16 %v367, %v367
    %v376 = vpack.c.bf16 %v368, %v368
    %v377 = vpack.c.bf16 %v369, %v369
    %v378 = vpack.c.bf16 %v370, %v370
    %v379 = vpack.c.bf16 %v371, %v371
    %v380 = vpack.c.bf16 %v372, %v372
    %v383 = vunpack.c.l.b16 %v373
    %v384 = vunpack.c.l.b16 %v374
    %v385 = vpack.c.b16 %v384, %v383
    %386 = vrot.lane.b32.xlu0 %v183, 32
    %v387 = vpop.permute.xlu0 %386
    %v390 = vsel %vm186, %v385, 0
    %392 = vmatpush.bf16.msra.mxu0 0
    %393 = vmatpush.bf16.msra.mxu0 0
    %394 = vmatpush.bf16.msra.mxu0 0
    %395 = vmatpush.bf16.msra.mxu0 0
    %396 = vmatpush.bf16.msra.mxu0 0
    %397 = vmatpush.bf16.msra.mxu0 0
    %398 = vmatpush.bf16.msra.mxu0 0
    %399 = vmatpush.bf16.msra.mxu0 %v387
    %400 = vmatmul.bf16.gmra.mxu0 %v390
    %v401 = vpop.f32.mrf.mxu0
    %v402 = vadd.f32 0.0, %v401
    %v403 = vpop.f32.mrf.mxu0
    %v404 = vadd.f32 0.0, %v403
    %405 = vdwg.mxu0
    %v406 = vpack.c.bf16 %v402, %v402
    %v407 = vpack.c.bf16 %v404, %v404
    %vm408 = vcmask 125952
    %409 = vst.msk [vmem:[#allocation2] sm:$0xf] %vm408, %v406
    %410 = vst.msk [vmem:[#allocation2 + $0x4] sm:$0xf] %vm408, %v407
    %v413 = vunpack.c.l.b16 %v375
    %v414 = vunpack.c.l.b16 %v376
    %v415 = vpack.c.b16 %v414, %v413
    %v417 = vsel %vm186, %v415, 0
    %419 = vmatpush.bf16.msra.mxu0 0
    %420 = vmatpush.bf16.msra.mxu0 0
    %421 = vmatpush.bf16.msra.mxu0 0
    %422 = vmatpush.bf16.msra.mxu0 0
    %423 = vmatpush.bf16.msra.mxu0 0
    %424 = vmatpush.bf16.msra.mxu0 0
    %425 = vmatpush.bf16.msra.mxu0 0
    %426 = vmatpush.bf16.msra.mxu0 %v387
    %427 = vmatmul.bf16.gmra.mxu0 %v417
    %v428 = vpop.f32.mrf.mxu0
    %v429 = vadd.f32 0.0, %v428
    %v430 = vpop.f32.mrf.mxu0
    %v431 = vadd.f32 0.0, %v430
    %432 = vdwg.mxu0
    %v433 = vpack.c.bf16 %v429, %v429
    %v434 = vpack.c.bf16 %v431, %v431
    %437 = vrot.lane.b32.xlu0 %v433, 16
    %v438 = vpop.permute.xlu0 %437
    %439 = vrot.lane.b32.xlu0 %v434, 16
    %v440 = vpop.permute.xlu0 %439
    %vm443 = vcmask 257152
    %444 = vst.msk [vmem:[#allocation2] sm:$0xf] %vm443, %v438
    %445 = vst.msk [vmem:[#allocation2 + $0x4] sm:$0xf] %vm443, %v440
    %v448 = vunpack.c.l.b16 %v377
    %v449 = vunpack.c.l.b16 %v378
    %v450 = vpack.c.b16 %v449, %v448
    %451 = vrot.lane.b32.xlu0 %v183, 16
    %v452 = vpop.permute.xlu0 %451
    %v455 = vsel %vm186, %v450, 0
    %457 = vmatpush.bf16.msra.mxu0 0
    %458 = vmatpush.bf16.msra.mxu0 0
    %459 = vmatpush.bf16.msra.mxu0 0
    %460 = vmatpush.bf16.msra.mxu0 0
    %461 = vmatpush.bf16.msra.mxu0 0
    %462 = vmatpush.bf16.msra.mxu0 0
    %463 = vmatpush.bf16.msra.mxu0 0
    %464 = vmatpush.bf16.msra.mxu0 %v452
    %465 = vmatmul.bf16.gmra.mxu0 %v455
    %v466 = vpop.f32.mrf.mxu0
    %v467 = vadd.f32 0.0, %v466
    %v468 = vpop.f32.mrf.mxu0
    %v469 = vadd.f32 0.0, %v468
    %470 = vdwg.mxu0
    %v471 = vpack.c.bf16 %v467, %v467
    %v472 = vpack.c.bf16 %v469, %v469
    %475 = vrot.lane.b32.xlu0 %v471, 32
    %v476 = vpop.permute.xlu0 %475
    %477 = vrot.lane.b32.xlu0 %v472, 32
    %v478 = vpop.permute.xlu0 %477
    %vm481 = vcmask 388352
    %482 = vst.msk [vmem:[#allocation2] sm:$0xf] %vm481, %v476
    %483 = vst.msk [vmem:[#allocation2 + $0x4] sm:$0xf] %vm481, %v478
    %v486 = vunpack.c.l.b16 %v379
    %v487 = vunpack.c.l.b16 %v380
    %v488 = vpack.c.b16 %v487, %v486
    %v490 = vsel %vm186, %v488, 0
    %492 = vmatpush.bf16.msra.mxu0 0
    %493 = vmatpush.bf16.msra.mxu0 0
    %494 = vmatpush.bf16.msra.mxu0 0
    %495 = vmatpush.bf16.msra.mxu0 0
    %496 = vmatpush.bf16.msra.mxu0 0
    %497 = vmatpush.bf16.msra.mxu0 0
    %498 = vmatpush.bf16.msra.mxu0 0
    %499 = vmatpush.bf16.msra.mxu0 %v452
    %500 = vmatmul.bf16.gmra.mxu0 %v490
    %v501 = vpop.f32.mrf.mxu0
    %v502 = vadd.f32 0.0, %v501
    %v503 = vpop.f32.mrf.mxu0
    %v504 = vadd.f32 0.0, %v503
    %505 = vdwg.mxu0
    %v506 = vpack.c.bf16 %v502, %v502
    %v507 = vpack.c.bf16 %v504, %v504
    %510 = vrot.lane.b32.xlu0 %v506, 48
    %v511 = vpop.permute.xlu0 %510
    %512 = vrot.lane.b32.xlu0 %v507, 48
    %v513 = vpop.permute.xlu0 %512
    %vm516 = vcmask 519552
    %517 = vst.msk [vmem:[#allocation2] sm:$0xf] %vm516, %v511
    %518 = vst.msk [vmem:[#allocation2 + $0x4] sm:$0xf] %vm516, %v513
    %v519 = vld [vmem:[#allocation2] sm:$0xf]
    %v520 = vld [vmem:[#allocation2 + $0x4] sm:$0xf]
    %v521 = vld [vmem:[%s6] sm:$0xf]
    %v522 = vld [vmem:[%s6 + $0x4] sm:$0xf]
    %v523 = vld [vmem:[%s6 + $0x8] sm:$0xf]
    %v524 = vld [vmem:[%s6 + $0xc] sm:$0xf]
    %v525 = vld [vmem:[%s6 + $0x10] sm:$0xf]
    %v526 = vld [vmem:[%s6 + $0x14] sm:$0xf]
    %v527 = vld [vmem:[%s6 + $0x18] sm:$0xf]
    %v528 = vld [vmem:[%s6 + $0x1c] sm:$0xf]
    %v531 = vunpack.c.l.b16 %v519
    %v532 = vunpack.c.l.b16 %v520
    %v533 = vpack.c.b16 %v532, %v531
    %v542 = vunpack.c.l.b16 %v521
    %v543 = vunpack.c.l.b16 %v522
    %v544 = vunpack.c.l.b16 %v523
    %v545 = vunpack.c.l.b16 %v524
    %v546 = vunpack.c.l.b16 %v525
    %v547 = vunpack.c.l.b16 %v526
    %v548 = vunpack.c.l.b16 %v527
    %v549 = vunpack.c.l.b16 %v528
    %v550 = vpack.c.b16 %v543, %v542
    %v551 = vpack.c.b16 %v545, %v544
    %v552 = vpack.c.b16 %v547, %v546
    %v553 = vpack.c.b16 %v549, %v548
    %v559 = vsel %vm42, %v533, 0
    %561 = vmatpush.bf16.msra.mxu0 0
    %562 = vmatpush.bf16.msra.mxu0 0
    %563 = vmatpush.bf16.msra.mxu0 0
    %564 = vmatpush.bf16.msra.mxu0 0
    %565 = vmatpush.bf16.msra.mxu0 %v553
    %566 = vmatpush.bf16.msra.mxu0 %v552
    %567 = vmatpush.bf16.msra.mxu0 %v551
    %568 = vmatpush.bf16.msra.mxu0 %v550
    %569 = vmatmul.bf16.gmra.mxu0 %v559
    %v570 = vpop.f32.mrf.mxu0
    %v571 = vadd.f32 0.0, %v570
    %v572 = vpop.f32.mrf.mxu0
    %v573 = vadd.f32 0.0, %v572
    %574 = vdwg.mxu0
    %v575 = vadd.f32 %v37, %v571
    %v576 = vadd.f32 %v38, %v573
    %v577 = vld [vmem:[%s7] sm:$0x1]
    %v578 = vmul.f32 %v575, %v575
    %v579 = vmul.f32 %v576, %v576
    %v580 = vsel %vm42, %v578, 0.0
    %581 = vadd.xlane.f32.xlu0 %v580
    %v582 = vpop.xlane.xlu0 %581
    %v583 = vsel %vm42, %v579, 0.0
    %584 = vadd.xlane.f32.xlu0 %v583
    %v585 = vpop.xlane.xlu0 %584
    %v586 = vmul.f32 %v582, %v55
    %v587 = vmul.f32 %v585, %v55
    %v588 = vadd.f32 %v586, 1e-05
    %v589 = vadd.f32 %v587, 1e-05
    %v590 = vrsqrt.pop %v588
    %v591 = vmul.f32 %v590, %v588
    %v592 = vmul.f32 %v591, %v590
    %v593 = vmul.f32 0.5, %v592
    %v594 = vsub.f32 1.5, %v593
    %v595 = vmul.f32 %v590, %v594
    %vm596 = vweird.f32 %v588
    %vm597 = vweird.f32 %v590
    %vm598 = vmor %vm596, %vm597
    %v599 = vsel %vm598, %v590, %v595
    %v600 = vrsqrt.pop %v589
    %v601 = vmul.f32 %v600, %v589
    %v602 = vmul.f32 %v601, %v600
    %v603 = vmul.f32 0.5, %v602
    %v604 = vsub.f32 1.5, %v603
    %v605 = vmul.f32 %v600, %v604
    %vm606 = vweird.f32 %v589
    %vm607 = vweird.f32 %v600
    %vm608 = vmor %vm606, %vm607
    %v609 = vsel %vm608, %v600, %v605
    %v610 = vmul.f32 %v575, %v599
    %v611 = vmul.f32 %v576, %v609
    %v613 = vperm.slane %v577, 0
    %v615 = vmul.f32 %v610, %v613
    %v616 = vmul.f32 %v611, %v613
    %v617 = vpack.c.bf16 %v616, %v615
    %v618 = vld [vmem:[%s8] sm:$0xff]
    %v619 = vld [vmem:[%s8 + $0x8] sm:$0xff]
    %v620 = vld [vmem:[%s8 + $0x10] sm:$0xff]
    %v621 = vld [vmem:[%s8 + $0x18] sm:$0xff]
    %v622 = vld [vmem:[%s8 + $0x20] sm:$0xff]
    %v623 = vld [vmem:[%s8 + $0x28] sm:$0xff]
    %v624 = vld [vmem:[%s8 + $0x30] sm:$0xff]
    %v625 = vld [vmem:[%s8 + $0x38] sm:$0xff]
    %v634 = vunpack.c.l.b16 %v618
    %v635 = vunpack.c.h.b16 %v618
    %v636 = vunpack.c.l.b16 %v619
    %v637 = vunpack.c.h.b16 %v619
    %v638 = vunpack.c.l.b16 %v620
    %v639 = vunpack.c.h.b16 %v620
    %v640 = vunpack.c.l.b16 %v621
    %v641 = vunpack.c.h.b16 %v621
    %v642 = vunpack.c.l.b16 %v622
    %v643 = vunpack.c.h.b16 %v622
    %v644 = vunpack.c.l.b16 %v623
    %v645 = vunpack.c.h.b16 %v623
    %v646 = vunpack.c.l.b16 %v624
    %v647 = vunpack.c.h.b16 %v624
    %v648 = vunpack.c.l.b16 %v625
    %v649 = vunpack.c.h.b16 %v625
    %v650 = vpack.c.b16 %v636, %v634
    %v651 = vpack.c.b16 %v637, %v635
    %v652 = vpack.c.b16 %v640, %v638
    %v653 = vpack.c.b16 %v641, %v639
    %v654 = vpack.c.b16 %v644, %v642
    %v655 = vpack.c.b16 %v645, %v643
    %v656 = vpack.c.b16 %v648, %v646
    %v657 = vpack.c.b16 %v649, %v647
    %v667 = vsel %vm42, %v617, 0
    %669 = vmatpush.bf16.msra.mxu0 0
    %670 = vmatpush.bf16.msra.mxu0 0
    %671 = vmatpush.bf16.msra.mxu0 0
    %672 = vmatpush.bf16.msra.mxu0 0
    %673 = vmatpush.bf16.msra.mxu0 %v656
    %674 = vmatpush.bf16.msra.mxu0 %v654
    %675 = vmatpush.bf16.msra.mxu0 %v652
    %676 = vmatpush.bf16.msra.mxu0 %v650
    %677 = vmatmul.bf16.gmra.mxu0 %v667
    %v678 = vpop.f32.mrf.mxu0
    %v679 = vadd.f32 0.0, %v678
    %v680 = vpop.f32.mrf.mxu0
    %v681 = vadd.f32 0.0, %v680
    %682 = vdwg.mxu0
    %683 = vmatpush.bf16.msra.mxu0 0
    %684 = vmatpush.bf16.msra.mxu0 0
    %685 = vmatpush.bf16.msra.mxu0 0
    %686 = vmatpush.bf16.msra.mxu0 0
    %687 = vmatpush.bf16.msra.mxu0 %v657
    %688 = vmatpush.bf16.msra.mxu0 %v655
    %689 = vmatpush.bf16.msra.mxu0 %v653
    %690 = vmatpush.bf16.msra.mxu0 %v651
    %691 = vmatmul.bf16.gmra.mxu0 %v667
    %v692 = vpop.f32.mrf.mxu0
    %v693 = vadd.f32 0.0, %v692
    %v694 = vpop.f32.mrf.mxu0
    %v695 = vadd.f32 0.0, %v694
    %696 = vdwg.mxu0
    %v697 = vxor.u32 %v679, 2147483648
    %v698 = vxor.u32 %v681, 2147483648
    %v699 = vmul.f32 %v697, 1.442695
    %v700 = vpow.pop %v699
    %v701 = vmul.f32 %v698, 1.442695
    %v702 = vpow.pop %v701
    %v703 = vadd.f32 %v700, 1.0
    %v704 = vadd.f32 %v702, 1.0
    %v705 = vrcp.pop %v703
    %v706 = vmul.f32 %v703, %v705
    %v707 = vsub.f32 1.0, %v706
    %v708 = vmul.f32 %v705, %v707
    %v709 = vadd.f32 %v705, %v708
    %vm710 = vweird.f32 %v703
    %vm711 = vweird.f32 %v705
    %vm712 = vmor %vm710, %vm711
    %v713 = vsel %vm712, %v705, %v709
    %v714 = vand.u32 2147483647, %v703
    %vm715 = vcmp.eq.f32.partialorder %v714, 8.507059e+37
    %v716 = vand.u32 %v703, 2147483648
    %v717 = vor.u32 1.1754944e-38, %v716
    %v718 = vsel %vm715, %v717, %v713
    %v719 = vmul.f32 1.0, %v718
    %v720 = vrcp.pop %v704
    %v721 = vmul.f32 %v704, %v720
    %v722 = vsub.f32 1.0, %v721
    %v723 = vmul.f32 %v720, %v722
    %v724 = vadd.f32 %v720, %v723
    %vm725 = vweird.f32 %v704
    %vm726 = vweird.f32 %v720
    %vm727 = vmor %vm725, %vm726
    %v728 = vsel %vm727, %v720, %v724
    %v729 = vand.u32 2147483647, %v704
    %vm730 = vcmp.eq.f32.partialorder %v729, 8.507059e+37
    %v731 = vand.u32 %v704, 2147483648
    %v732 = vor.u32 1.1754944e-38, %v731
    %v733 = vsel %vm730, %v732, %v728
    %v734 = vmul.f32 1.0, %v733
    %v735 = vmul.f32 %v679, %v719
    %v736 = vmul.f32 %v681, %v734
    %v737 = vmul.f32 %v735, %v693
    %v738 = vmul.f32 %v736, %v695
    %v739 = vpack.c.bf16 %v738, %v737
    %v740 = vld [vmem:[%s9] sm:$0xf]
    %v741 = vld [vmem:[%s9 + $0x4] sm:$0xf]
    %v742 = vld [vmem:[%s9 + $0x8] sm:$0xf]
    %v743 = vld [vmem:[%s9 + $0xc] sm:$0xf]
    %v744 = vld [vmem:[%s9 + $0x10] sm:$0xf]
    %v745 = vld [vmem:[%s9 + $0x14] sm:$0xf]
    %v746 = vld [vmem:[%s9 + $0x18] sm:$0xf]
    %v747 = vld [vmem:[%s9 + $0x1c] sm:$0xf]
    %v748 = vld [vmem:[%s9 + $0x20] sm:$0xf]
    %v749 = vld [vmem:[%s9 + $0x24] sm:$0xf]
    %v750 = vld [vmem:[%s9 + $0x28] sm:$0xf]
    %v751 = vld [vmem:[%s9 + $0x2c] sm:$0xf]
    %v752 = vld [vmem:[%s9 + $0x30] sm:$0xf]
    %v753 = vld [vmem:[%s9 + $0x34] sm:$0xf]
    %v754 = vld [vmem:[%s9 + $0x38] sm:$0xf]
    %v755 = vld [vmem:[%s9 + $0x3c] sm:$0xf]
    %v772 = vunpack.c.l.b16 %v740
    %v773 = vunpack.c.l.b16 %v741
    %v774 = vunpack.c.l.b16 %v742
    %v775 = vunpack.c.l.b16 %v743
    %v776 = vunpack.c.l.b16 %v744
    %v777 = vunpack.c.l.b16 %v745
    %v778 = vunpack.c.l.b16 %v746
    %v779 = vunpack.c.l.b16 %v747
    %v780 = vunpack.c.l.b16 %v748
    %v781 = vunpack.c.l.b16 %v749
    %v782 = vunpack.c.l.b16 %v750
    %v783 = vunpack.c.l.b16 %v751
    %v784 = vunpack.c.l.b16 %v752
    %v785 = vunpack.c.l.b16 %v753
    %v786 = vunpack.c.l.b16 %v754
    %v787 = vunpack.c.l.b16 %v755
    %v788 = vpack.c.b16 %v773, %v772
    %v789 = vpack.c.b16 %v775, %v774
    %v790 = vpack.c.b16 %v777, %v776
    %v791 = vpack.c.b16 %v779, %v778
    %v792 = vpack.c.b16 %v781, %v780
    %v793 = vpack.c.b16 %v783, %v782
    %v794 = vpack.c.b16 %v785, %v784
    %v795 = vpack.c.b16 %v787, %v786
    %804 = vmatpush.bf16.msra.mxu0 %v795
    %805 = vmatpush.bf16.msra.mxu0 %v794
    %806 = vmatpush.bf16.msra.mxu0 %v793
    %807 = vmatpush.bf16.msra.mxu0 %v792
    %808 = vmatpush.bf16.msra.mxu0 %v791
    %809 = vmatpush.bf16.msra.mxu0 %v790
    %810 = vmatpush.bf16.msra.mxu0 %v789
    %811 = vmatpush.bf16.msra.mxu0 %v788
    %812 = vmatmul.bf16.gmra.mxu0 %v739
    %v813 = vpop.f32.mrf.mxu0
    %v814 = vadd.f32 0.0, %v813
    %v815 = vpop.f32.mrf.mxu0
    %v816 = vadd.f32 0.0, %v815
    %817 = vdwg.mxu0
    %v818 = vadd.f32 %v575, %v814
    %v819 = vadd.f32 %v576, %v816
    %820 = vst.msk [vmem:[#allocation3] sm:$0xff] %vm42, %v818
    %821 = vst.msk [vmem:[#allocation3 + $0x8] sm:$0xff] %vm42, %v819
    // Predicated region
    $region42: #{transformer_block.1} parent=1 // pred_check
      _
    $region43: #{transformer_block.1} parent=1 // pred_check_branch
      %823 = sbr.rel (0) target = $region45
    $region44: #{transformer_block.1} parent=1 // pred_region
      %825 = vsyncadd [#allocation4], 0
      %s826 = sshll.u32 [#allocation3], 4
      %s827 = int_to_ptr.vmem [resolvable:$true] %s826
      %s828 = sshll.u32 %s10, 4
      %s829 = int_to_ptr.hbm [resolvable:$true] %s828
      %834 = dma.vmem_to_hbm [thread:$0]  %s827, 256, %s829, [#allocation4], 128, 128, 8
    $region45: #{transformer_block.1} parent=1 // pred_fallthru
      _
    // Predicated region
    $region46: #{transformer_block.1} parent=1 // pred_check
      _
    $region47: #{transformer_block.1} parent=1 // pred_check_branch
      %836 = sbr.rel (0) target = $region49
    $region48: #{transformer_block.1} parent=1 // pred_region
      %838 = dma.done [#allocation4], 256
    $region49: #{transformer_block.1} parent=1 // pred_fallthru
      _
    %839 = vsyncpa [#allocation4], 1

</llo_original>
